<compile_context>
chip_gen: v7x
topology: tpu7x:2x2x1
jax: 0.10.0
libtpu: 0.0.40
codegen_flags: <defaults>
</compile_context>

<pallas_src>
import functools
import math
from typing import NamedTuple

import jax
import jax.numpy as jnp
from jax.experimental import pallas as pl
from jax.experimental.pallas import tpu as pltpu


def _round_up(v, m):
    return ((v + m - 1) // m) * m


def _vmem_limit_bytes():
    """Generation-aware scoped-VMEM budget.

    v7x: 64 MiB physical per TC -> request ~48 MiB (3/4).
    v5e/v6e: 128 MiB physical -> request 64 MiB (1/2), capped at 96 MiB.
    """
    try:
        cap = pltpu.get_tpu_info().vmem_capacity_bytes
    except Exception:
        cap = 128 << 20
    if cap <= (64 << 20):
        limit = (cap * 3) // 4
    else:
        limit = min(cap // 2, 96 << 20)
    return int(max(16 << 20, limit))


class _Plan(NamedTuple):
    fused: bool
    n: int
    n_p: int
    tm: int
    tk: int
    nfeat: int
    nhid: int
    nclass: int
    nfeat_p: int
    nhid_p: int
    nclass_p: int
    resident_support: bool
    vmem_limit: int


def make_plan(n, nfeat, nhid, nclass, *, force_tiled=False, force_streamed=False):
    """Static tiling / residency decisions for a given problem size."""
    nfeat_p = _round_up(nfeat, 128)
    nhid_p = _round_up(nhid, 128)
    nclass_p = _round_up(nclass, 128)
    vmem_limit = _vmem_limit_bytes()

    # ---- fused single-kernel path: everything VMEM-resident ----------------
    n_pf = _round_up(n, 128)  # lane-dense adj blocks (multiple of 128, not 8)
    fused_bytes = (
        n_pf * n_pf * 2                                  # adj (bf16)
        + n_pf * nfeat_p * 2                             # x (bf16)
        + nfeat_p * nhid_p * 2 + nhid_p * nclass_p * 2   # weights (bf16)
        + 4 * n_pf * max(nhid_p, nclass_p) * 4           # f32 temporaries
        + n_pf * nclass_p * 4                            # output (f32)
    )
    if not force_tiled and fused_bytes <= int(0.6 * vmem_limit):
        return _Plan(True, n, n_pf, n_pf, n_pf, nfeat, nhid, nclass,
                     nfeat_p, nhid_p, nclass_p, True, vmem_limit)

    # ---- tiled path: 512x512 adj tiles, even row-block count for v7x -------
    n_p = _round_up(n, 512)
    tm = 512 if (n_p // 512) % 2 == 0 else 256   # keep #row-blocks even (2 TCs)
    tk = 512
    # TODO(synk): consider tm=1024 for very large graphs (n_p >= 8192).

    # Keep the (n_p, nhid_p) support / h1 matrix VMEM-resident in the agg
    # kernels when it fits (counting a conservative 2x for double buffering).
    resident_bytes = (
        2 * n_p * nhid_p * 2                    # resident support
        + 2 * tm * tk * 2                       # adj tiles (double buffered)
        + tm * max(nhid_p, nclass_p) * 4        # f32 accumulator
        + 2 * tm * max(nhid_p, nclass_p) * 4    # output tiles
        + nhid_p * nclass_p * 2 + (2 << 20)     # W2 + slack
    )
    resident = (not force_streamed) and resident_bytes <= int(0.7 * vmem_limit)
    return _Plan(False, n, n_p, tm, tk, nfeat, nhid, nclass,
                 nfeat_p, nhid_p, nclass_p, resident, vmem_limit)


# ---------------------------------------------------------------------------
# Fused path: one kernel does proj1 -> agg1+relu -> proj2 -> agg2+log_softmax
# ---------------------------------------------------------------------------
def _fused_kernel(x_ref, adj_ref, w1_ref, w2_ref, b1_ref, b2_ref, out_ref, *, nclass):
    bf = jnp.bfloat16
    adj = adj_ref[...]
    s1 = jnp.dot(x_ref[...], w1_ref[...], preferred_element_type=jnp.float32)
    h1 = jnp.dot(adj, s1.astype(bf), preferred_element_type=jnp.float32) + b1_ref[...]
    h1 = jnp.maximum(h1, 0.0)
    s2 = jnp.dot(h1.astype(bf), w2_ref[...], preferred_element_type=jnp.float32)
    h2 = jnp.dot(adj, s2.astype(bf), preferred_element_type=jnp.float32) + b2_ref[...]
    # masked log_softmax over the real class columns (padded cols -> -1e30)
    col = jax.lax.broadcasted_iota(jnp.int32, h2.shape, dimension=1)
    h2 = jnp.where(col < nclass, h2, jnp.float32(-1e30))
    m = jnp.max(h2, axis=1, keepdims=True)
    z = h2 - m
    lse = jnp.log(jnp.sum(jnp.exp(z), axis=1, keepdims=True))
    out_ref[...] = z - lse


def _fused_forward(x_p, adj_p, w1_p, w2_p, b1_p, b2_p, plan):
    n_p = plan.n_p
    kernel = functools.partial(_fused_kernel, nclass=plan.nclass)
    flops = 2 * n_p * (plan.nfeat_p * plan.nhid_p + n_p * plan.nhid_p
                       + plan.nhid_p * plan.nclass_p + n_p * plan.nclass_p)
    bytes_acc = int(x_p.size * 2 + adj_p.size * 2 + w1_p.size * 2 + w2_p.size * 2
                    + b1_p.size * 4 + b2_p.size * 4 + n_p * plan.nclass_p * 4)
    cost = pl.CostEstimate(flops=int(flops),
                           transcendentals=int(n_p * plan.nclass_p),
                           bytes_accessed=bytes_acc)
    return pl.pallas_call(
        kernel,
        out_shape=jax.ShapeDtypeStruct((n_p, plan.nclass_p), jnp.float32),
        grid_spec=pltpu.PrefetchScalarGridSpec(
            num_scalar_prefetch=0,
            grid=(1,),
            in_specs=[
                pl.BlockSpec((n_p, plan.nfeat_p), lambda i: (0, 0)),
                pl.BlockSpec((n_p, n_p), lambda i: (0, 0)),
                pl.BlockSpec((plan.nfeat_p, plan.nhid_p), lambda i: (0, 0)),
                pl.BlockSpec((plan.nhid_p, plan.nclass_p), lambda i: (0, 0)),
                pl.BlockSpec((1, plan.nhid_p), lambda i: (0, 0)),
                pl.BlockSpec((1, plan.nclass_p), lambda i: (0, 0)),
            ],
            out_specs=pl.BlockSpec((n_p, plan.nclass_p), lambda i: (0, 0)),
        ),
        compiler_params=pltpu.CompilerParams(
            dimension_semantics=("arbitrary",),
            vmem_limit_bytes=plan.vmem_limit,
        ),
        cost_estimate=cost,
    )(x_p, adj_p, w1_p, w2_p, b1_p, b2_p)


# ---------------------------------------------------------------------------
# Tiled path, kernel 1: feature projection   s1 = x @ W1
# ---------------------------------------------------------------------------
def _proj_kernel(x_ref, w_ref, out_ref):
    out_ref[...] = jnp.dot(
        x_ref[...], w_ref[...], preferred_element_type=jnp.float32
    ).astype(out_ref.dtype)


def _project(x_p, w_p, plan):
    n_p, din_p = x_p.shape
    dout_p = w_p.shape[1]
    tm = plan.tm
    cost = pl.CostEstimate(
        flops=int(2 * n_p * din_p * dout_p), transcendentals=0,
        bytes_accessed=int(x_p.size * 2 + w_p.size * 2 + n_p * dout_p * 2))
    return pl.pallas_call(
        _proj_kernel,
        out_shape=jax.ShapeDtypeStruct((n_p, dout_p), jnp.bfloat16),
        grid_spec=pltpu.PrefetchScalarGridSpec(
            num_scalar_prefetch=0,
            grid=(n_p // tm,),
            in_specs=[pl.BlockSpec((tm, din_p), lambda i: (i, 0)),
                      pl.BlockSpec((din_p, dout_p), lambda i: (0, 0))],
            out_specs=pl.BlockSpec((tm, dout_p), lambda i: (i, 0)),
        ),
        compiler_params=pltpu.CompilerParams(
            dimension_semantics=("parallel",),
            vmem_limit_bytes=plan.vmem_limit),
        cost_estimate=cost,
    )(x_p, w_p)


# ---------------------------------------------------------------------------
# Tiled path, kernel 2: h1 = relu(adj @ s1 + b1)   (resident or streamed s1)
# ---------------------------------------------------------------------------
def _agg_relu_kernel(adj_ref, s_ref, b_ref, out_ref, acc_ref, *, tk, resident):
    k = pl.program_id(1)

    @pl.when(k == 0)
    def _init():
        acc_ref[...] = jnp.zeros_like(acc_ref)

    if resident:
        s_blk = s_ref[pl.ds(pl.multiple_of(k * tk, tk), tk), :]
    else:
        s_blk = s_ref[...]
    acc_ref[...] += jnp.dot(adj_ref[...], s_blk, preferred_element_type=jnp.float32)

    @pl.when(k == pl.num_programs(1) - 1)
    def _finalize():
        out_ref[...] = jnp.maximum(acc_ref[...] + b_ref[...], 0.0).astype(out_ref.dtype)


def _aggregate_relu(adj_p, s1, b1_p, plan):
    n_p, tm, tk = plan.n_p, plan.tm, plan.tk
    dout_p = plan.nhid_p
    resident = plan.resident_support
    if resident:
        s_spec = pl.BlockSpec((n_p, dout_p), lambda i, k: (0, 0))   # VMEM resident
    else:
        s_spec = pl.BlockSpec((tk, dout_p), lambda i, k: (k, 0))    # streamed per-k
    kernel = functools.partial(_agg_relu_kernel, tk=tk, resident=resident)
    cost = pl.CostEstimate(
        flops=int(2 * n_p * n_p * dout_p), transcendentals=0,
        bytes_accessed=int(adj_p.size * 2 + s1.size * 2 + n_p * dout_p * 2))
    return pl.pallas_call(
        kernel,
        out_shape=jax.ShapeDtypeStruct((n_p, dout_p), jnp.bfloat16),
        grid_spec=pltpu.PrefetchScalarGridSpec(
            num_scalar_prefetch=0,
            grid=(n_p // tm, n_p // tk),
            in_specs=[pl.BlockSpec((tm, tk), lambda i, k: (i, k)),
                      s_spec,
                      pl.BlockSpec((1, dout_p), lambda i, k: (0, 0))],
            out_specs=pl.BlockSpec((tm, dout_p), lambda i, k: (i, 0)),
            scratch_shapes=[pltpu.VMEM((tm, dout_p), jnp.float32)],
        ),
        compiler_params=pltpu.CompilerParams(
            dimension_semantics=("parallel", "arbitrary"),
            vmem_limit_bytes=plan.vmem_limit),
        cost_estimate=cost,
    )(adj_p, s1, b1_p)


# ---------------------------------------------------------------------------
# Tiled path, kernel 3: out = log_softmax(adj @ (h1 @ W2) + b2)
#   layer-2 projection folded in (W2 VMEM-resident, support computed per k)
# ---------------------------------------------------------------------------
def _agg_softmax_kernel(adj_ref, h1_ref, w2_ref, b_ref, out_ref, acc_ref, *,
                        tk, resident, nclass):
    k = pl.program_id(1)

    @pl.when(k == 0)
    def _init():
        acc_ref[...] = jnp.zeros_like(acc_ref)

    if resident:
        h1_blk = h1_ref[pl.ds(pl.multiple_of(k * tk, tk), tk), :]
    else:
        h1_blk = h1_ref[...]
    s2_blk = jnp.dot(h1_blk, w2_ref[...],
                     preferred_element_type=jnp.float32).astype(jnp.bfloat16)
    acc_ref[...] += jnp.dot(adj_ref[...], s2_blk, preferred_element_type=jnp.float32)

    @pl.when(k == pl.num_programs(1) - 1)
    def _finalize():
        h = acc_ref[...] + b_ref[...]
        col = jax.lax.broadcasted_iota(jnp.int32, h.shape, dimension=1)
        h = jnp.where(col < nclass, h, jnp.float32(-1e30))
        m = jnp.max(h, axis=1, keepdims=True)
        z = h - m
        lse = jnp.log(jnp.sum(jnp.exp(z), axis=1, keepdims=True))
        out_ref[...] = (z - lse).astype(out_ref.dtype)


def _aggregate_softmax(adj_p, h1, w2_p, b2_p, plan):
    n_p, tm, tk = plan.n_p, plan.tm, plan.tk
    nhid_p, nclass_p = plan.nhid_p, plan.nclass_p
    resident = plan.resident_support
    if resident:
        h1_spec = pl.BlockSpec((n_p, nhid_p), lambda i, k: (0, 0))
    else:
        h1_spec = pl.BlockSpec((tk, nhid_p), lambda i, k: (k, 0))
    kernel = functools.partial(_agg_softmax_kernel, tk=tk, resident=resident,
                               nclass=plan.nclass)
    cost = pl.CostEstimate(
        flops=int(2 * n_p * n_p * nclass_p
                  + 2 * (n_p // tm) * n_p * nhid_p * nclass_p),
        transcendentals=int(n_p * nclass_p),
        bytes_accessed=int(adj_p.size * 2 + h1.size * 2 + w2_p.size * 2
                           + n_p * nclass_p * 4))
    return pl.pallas_call(
        kernel,
        out_shape=jax.ShapeDtypeStruct((n_p, nclass_p), jnp.float32),
        grid_spec=pltpu.PrefetchScalarGridSpec(
            num_scalar_prefetch=0,
            grid=(n_p // tm, n_p // tk),
            in_specs=[pl.BlockSpec((tm, tk), lambda i, k: (i, k)),
                      h1_spec,
                      pl.BlockSpec((nhid_p, nclass_p), lambda i, k: (0, 0)),
                      pl.BlockSpec((1, nclass_p), lambda i, k: (0, 0))],
            out_specs=pl.BlockSpec((tm, nclass_p), lambda i, k: (i, 0)),
            scratch_shapes=[pltpu.VMEM((tm, nclass_p), jnp.float32)],
        ),
        compiler_params=pltpu.CompilerParams(
            dimension_semantics=("parallel", "arbitrary"),
            vmem_limit_bytes=plan.vmem_limit),
        cost_estimate=cost,
    )(adj_p, h1, w2_p, b2_p)


# ---------------------------------------------------------------------------
# Wrappers
# ---------------------------------------------------------------------------
def _pad2(a, rows, cols, dtype):
    a = jnp.asarray(a)
    out = jnp.zeros((rows, cols), dtype)
    return out.at[: a.shape[0], : a.shape[1]].set(a.astype(dtype))


def gcn_preprocess(adj, w1, b1, w2, b2, plan):
    """Pad + cast the static operands ONCE (hoisted out of the per-call path)."""
    bf = jnp.bfloat16
    b1 = jnp.asarray(b1).reshape(1, -1)
    b2 = jnp.asarray(b2).reshape(1, -1)
    return dict(
        adj=_pad2(adj, plan.n_p, plan.n_p, bf),
        w1=_pad2(w1, plan.nfeat_p, plan.nhid_p, bf),
        w2=_pad2(w2, plan.nhid_p, plan.nclass_p, bf),
        b1=_pad2(b1, 1, plan.nhid_p, jnp.float32),
        b2=_pad2(b2, 1, plan.nclass_p, jnp.float32),
    )


def gcn_forward(x, prepared, plan):
    """Eval-mode GCN_drop_in forward (dropout = identity). Only x is padded here."""
    x_p = _pad2(x, plan.n_p, plan.nfeat_p, jnp.bfloat16)
    if plan.fused:
        out_p = _fused_forward(x_p, prepared["adj"], prepared["w1"], prepared["w2"],
                               prepared["b1"], prepared["b2"], plan)
    else:
        s1 = _project(x_p, prepared["w1"], plan)
        h1 = _aggregate_relu(prepared["adj"], s1, prepared["b1"], plan)
        out_p = _aggregate_softmax(prepared["adj"], h1, prepared["w2"],
                                   prepared["b2"], plan)
    return out_p[: plan.n, : plan.nclass]


def gcn_drop_in_forward(x, adj, w1, b1, w2, b2, *,
                        force_tiled=False, force_streamed=False):
    """One-shot convenience wrapper (plan + preprocess + forward)."""
    n, nfeat = x.shape
    nhid = w1.shape[1]
    nclass = w2.shape[1]
    plan = make_plan(n, nfeat, nhid, nclass,
                     force_tiled=force_tiled, force_streamed=force_streamed)
    prepared = gcn_preprocess(adj, w1, b1, w2, b2, plan)
    return gcn_forward(x, prepared, plan)


# ---------------------------------------------------------------------------
# Reference / test harness
# ---------------------------------------------------------------------------
def xavier_normal(key, shape, gain=0.02):
    """Matches torch.nn.init.xavier_normal_ for a 2-D weight."""
    fan_in, fan_out = shape
    std = gain * math.sqrt(2.0 / (fan_in + fan_out))
    return std * jax.random.normal(key, shape, dtype=jnp.float32)


def reference_forward(x, adj, w1, b1, w2, b2):
    h1 = jnp.maximum(adj @ (x @ w1) + b1, 0.0)
    h2 = adj @ (h1 @ w2) + b2
    return jax.nn.log_softmax(h2, axis=1)


def _make_graph(key, n, nfeat, density):
    kx, ka = jax.random.split(key)
    x = jax.random.normal(kx, (n, nfeat), dtype=jnp.float32)
    a = (jax.random.uniform(ka, (n, n)) < density).astype(jnp.float32)
    a = jnp.maximum(a, a.T) + jnp.eye(n, dtype=jnp.float32)
    adj = a / jnp.sum(a, axis=1, keepdims=True)
    return x, adj


if __name__ == "__main__":
    # NOTE: gain=1.0 (instead of the module's default 0.02) so the logits have
    # real spread and the numerical check is discriminative; the dataflow is
    # identical.
    TOL = 2e-2  # bf16 operands with f32 accumulation vs pure-f32 reference

    # ---- test 1: small graph -> fully fused single-kernel path -------------
    N, NFEAT, NHID, NCLASS = 16, 8, 32, 8
    kg, kw1, kw2 = jax.random.split(jax.random.PRNGKey(0), 3)
    x, adj = _make_graph(kg, N, NFEAT, density=0.3)
    w1 = xavier_normal(kw1, (NFEAT, NHID), gain=1.0)
    b1 = jnp.zeros((1, NHID), jnp.float32)
    w2 = xavier_normal(kw2, (NHID, NCLASS), gain=1.0)
    b2 = jnp.zeros((1, NCLASS), jnp.float32)

    plan = make_plan(N, NFEAT, NHID, NCLASS)
    assert plan.fused
    out = jax.block_until_ready(gcn_drop_in_forward(x, adj, w1, b1, w2, b2))
    ref = reference_forward(x, adj, w1, b1, w2, b2)
    assert out.shape == (N, NCLASS)
    err = float(jnp.max(jnp.abs(out - ref)))
    assert err < TOL, f"fused path max err {err}"

    # ---- tests 2/3: larger graph -> tiled path (resident & streamed support)
    N2, NFEAT2, NHID2, NCLASS2 = 640, 100, 64, 10
    kg, kw1, kw2 = jax.random.split(jax.random.PRNGKey(1), 3)
    x2, adj2 = _make_graph(kg, N2, NFEAT2, density=0.01)
    w1b = xavier_normal(kw1, (NFEAT2, NHID2), gain=1.0)
    b1b = jnp.zeros((1, NHID2), jnp.float32)
    w2b = xavier_normal(kw2, (NHID2, NCLASS2), gain=1.0)
    b2b = jnp.zeros((1, NCLASS2), jnp.float32)
    ref2 = reference_forward(x2, adj2, w1b, b1b, w2b, b2b)

    for force_streamed in (False, True):
        plan2 = make_plan(N2, NFEAT2, NHID2, NCLASS2,
                          force_tiled=True, force_streamed=force_streamed)
        assert not plan2.fused
        assert (plan2.n_p // plan2.tm) % 2 == 0       # even row blocks (v7x 2 TCs)
        prepared2 = gcn_preprocess(adj2, w1b, b1b, w2b, b2b, plan2)  # hoisted once
        out2 = jax.block_until_ready(gcn_forward(x2, prepared2, plan2))
        assert out2.shape == (N2, NCLASS2)
        err2 = float(jnp.max(jnp.abs(out2 - ref2)))
        assert err2 < TOL, f"tiled path (streamed={force_streamed}) max err {err2}"

    print("KERNEL_OK")
</pallas_src>

<mosaic_0001>
module attributes {stable_mosaic.version = 11 : i64} {
  func.func @_fused_kernel(%arg0: i32, %arg1: memref<128x128xbf16, #tpu.memory_space<vmem>>, %arg2: memref<128x128xbf16, #tpu.memory_space<vmem>>, %arg3: memref<128x128xbf16, #tpu.memory_space<vmem>>, %arg4: memref<128x128xbf16, #tpu.memory_space<vmem>>, %arg5: memref<1x128xf32, #tpu.memory_space<vmem>>, %arg6: memref<1x128xf32, #tpu.memory_space<vmem>>, %arg7: memref<128x128xf32, #tpu.memory_space<vmem>>) attributes {dimension_semantics = [#tpu.dimension_semantics<arbitrary>], iteration_bounds = array<i64: 1>, scalar_prefetch = 0 : i64, scratch_operands = 0 : i64, tpu.core_type = #tpu.core_type<tc>, window_params = [{pipeline_mode = #tpu.pipeline_mode<synchronous>, transform_indices = @transform_0, window_bounds = array<i64: 128, 128>}, {pipeline_mode = #tpu.pipeline_mode<synchronous>, transform_indices = @transform_1, window_bounds = array<i64: 128, 128>}, {pipeline_mode = #tpu.pipeline_mode<synchronous>, transform_indices = @transform_2, window_bounds = array<i64: 128, 128>}, {pipeline_mode = #tpu.pipeline_mode<synchronous>, transform_indices = @transform_3, window_bounds = array<i64: 128, 128>}, {pipeline_mode = #tpu.pipeline_mode<synchronous>, transform_indices = @transform_4, window_bounds = array<i64: 1, 128>}, {pipeline_mode = #tpu.pipeline_mode<synchronous>, transform_indices = @transform_5, window_bounds = array<i64: 1, 128>}, {pipeline_mode = #tpu.pipeline_mode<synchronous>, transform_indices = @transform_6, window_bounds = array<i64: 128, 128>}]} {
    %c0 = arith.constant 0 : index
    %c0_0 = arith.constant 0 : index
    %0 = vector.load %arg2[%c0, %c0_0] : memref<128x128xbf16, #tpu.memory_space<vmem>>, vector<128x128xbf16>
    %c0_1 = arith.constant 0 : index
    %c0_2 = arith.constant 0 : index
    %1 = vector.load %arg1[%c0_1, %c0_2] : memref<128x128xbf16, #tpu.memory_space<vmem>>, vector<128x128xbf16>
    %c0_3 = arith.constant 0 : index
    %c0_4 = arith.constant 0 : index
    %2 = vector.load %arg3[%c0_3, %c0_4] : memref<128x128xbf16, #tpu.memory_space<vmem>>, vector<128x128xbf16>
    %cst = arith.constant dense<0.000000e+00> : vector<128x128xf32>
    %3 = tpu.matmul %1, %2, %cst {dimension_numbers = #tpu.dot_dimension_numbers<[1], [0], [0], [1], [0, 0, 1, 1], [], []>} : vector<128x128xbf16>, vector<128x128xbf16>, vector<128x128xf32> -> vector<128x128xf32>
    %4 = arith.truncf %3 : vector<128x128xf32> to vector<128x128xbf16>
    %cst_5 = arith.constant dense<0.000000e+00> : vector<128x128xf32>
    %5 = tpu.matmul %0, %4, %cst_5 {dimension_numbers = #tpu.dot_dimension_numbers<[1], [0], [0], [1], [0, 0, 1, 1], [], []>} : vector<128x128xbf16>, vector<128x128xbf16>, vector<128x128xf32> -> vector<128x128xf32>
    %c0_6 = arith.constant 0 : index
    %c0_7 = arith.constant 0 : index
    %6 = vector.load %arg5[%c0_6, %c0_7] : memref<1x128xf32, #tpu.memory_space<vmem>>, vector<1x128xf32>
    %7 = vector.broadcast %6 : vector<1x128xf32> to vector<128x128xf32>
    %8 = arith.addf %5, %7 : vector<128x128xf32>
    %cst_8 = arith.constant 0.000000e+00 : f32
    %9 = vector.broadcast %cst_8 : f32 to vector<128x128xf32>
    %10 = arith.maximumf %8, %9 : vector<128x128xf32>
    %11 = arith.truncf %10 : vector<128x128xf32> to vector<128x128xbf16>
    %c0_9 = arith.constant 0 : index
    %c0_10 = arith.constant 0 : index
    %12 = vector.load %arg4[%c0_9, %c0_10] : memref<128x128xbf16, #tpu.memory_space<vmem>>, vector<128x128xbf16>
    %cst_11 = arith.constant dense<0.000000e+00> : vector<128x128xf32>
    %13 = tpu.matmul %11, %12, %cst_11 {dimension_numbers = #tpu.dot_dimension_numbers<[1], [0], [0], [1], [0, 0, 1, 1], [], []>} : vector<128x128xbf16>, vector<128x128xbf16>, vector<128x128xf32> -> vector<128x128xf32>
    %14 = arith.truncf %13 : vector<128x128xf32> to vector<128x128xbf16>
    %cst_12 = arith.constant dense<0.000000e+00> : vector<128x128xf32>
    %15 = tpu.matmul %0, %14, %cst_12 {dimension_numbers = #tpu.dot_dimension_numbers<[1], [0], [0], [1], [0, 0, 1, 1], [], []>} : vector<128x128xbf16>, vector<128x128xbf16>, vector<128x128xf32> -> vector<128x128xf32>
    %c0_13 = arith.constant 0 : index
    %c0_14 = arith.constant 0 : index
    %16 = vector.load %arg6[%c0_13, %c0_14] : memref<1x128xf32, #tpu.memory_space<vmem>>, vector<1x128xf32>
    %17 = vector.broadcast %16 : vector<1x128xf32> to vector<128x128xf32>
    %18 = arith.addf %15, %17 : vector<128x128xf32>
    %19 = tpu.iota {dimensions = array<i32: 1>} : vector<128x128xi32>
    %c8_i32 = arith.constant 8 : i32
    %20 = vector.broadcast %c8_i32 : i32 to vector<128x128xi32>
    %21 = arith.cmpi slt, %19, %20 : vector<128x128xi32>
    %cst_15 = arith.constant -1.000000e+30 : f32
    %22 = vector.broadcast %cst_15 : f32 to vector<128x128xf32>
    %23 = arith.select %21, %18, %22 : vector<128x128xi1>, vector<128x128xf32>
    %cst_16 = arith.constant dense<0xFF800000> : vector<128xf32>
    %24 = vector.multi_reduction <maximumf>, %23, %cst_16 [1] : vector<128x128xf32> to vector<128xf32>
    %25 = vector.shape_cast %24 : vector<128xf32> to vector<128x1xf32>
    %26 = vector.broadcast %25 : vector<128x1xf32> to vector<128x128xf32>
    %27 = arith.subf %23, %26 : vector<128x128xf32>
    %28 = math.exp %27 : vector<128x128xf32>
    %cst_17 = arith.constant dense<0.000000e+00> : vector<128xf32>
    %29 = vector.multi_reduction <add>, %28, %cst_17 [1] : vector<128x128xf32> to vector<128xf32>
    %30 = vector.shape_cast %29 : vector<128xf32> to vector<128x1xf32>
    %31 = math.log %30 : vector<128x1xf32>
    %32 = vector.broadcast %31 : vector<128x1xf32> to vector<128x128xf32>
    %33 = arith.subf %27, %32 : vector<128x128xf32>
    %c0_18 = arith.constant 0 : index
    %c0_19 = arith.constant 0 : index
    %34 = vector.load %arg7[%c0_18, %c0_19] : memref<128x128xf32, #tpu.memory_space<vmem>>, vector<128x128xf32>
    tpu.vector_store %arg7[%c0_18, %c0_19], %33 {strides = array<i32>} : memref<128x128xf32, #tpu.memory_space<vmem>>, vector<128x128xf32>,
    return
  }
  func.func @transform_0(%arg0: i32) -> (i32, i32) {
    %c0_i32 = arith.constant 0 : i32
    %c0_i32_0 = arith.constant 0 : i32
    %c0_i32_1 = arith.constant 0 : i32
    return %c0_i32, %c0_i32_0 : i32, i32
  }
  func.func @transform_1(%arg0: i32) -> (i32, i32) {
    %c0_i32 = arith.constant 0 : i32
    %c0_i32_0 = arith.constant 0 : i32
    %c0_i32_1 = arith.constant 0 : i32
    return %c0_i32, %c0_i32_0 : i32, i32
  }
  func.func @transform_2(%arg0: i32) -> (i32, i32) {
    %c0_i32 = arith.constant 0 : i32
    %c0_i32_0 = arith.constant 0 : i32
    %c0_i32_1 = arith.constant 0 : i32
    return %c0_i32, %c0_i32_0 : i32, i32
  }
  func.func @transform_3(%arg0: i32) -> (i32, i32) {
    %c0_i32 = arith.constant 0 : i32
    %c0_i32_0 = arith.constant 0 : i32
    %c0_i32_1 = arith.constant 0 : i32
    return %c0_i32, %c0_i32_0 : i32, i32
  }
  func.func @transform_4(%arg0: i32) -> (i32, i32) {
    %c0_i32 = arith.constant 0 : i32
    %c0_i32_0 = arith.constant 0 : i32
    %c0_i32_1 = arith.constant 0 : i32
    return %c0_i32, %c0_i32_0 : i32, i32
  }
  func.func @transform_5(%arg0: i32) -> (i32, i32) {
    %c0_i32 = arith.constant 0 : i32
    %c0_i32_0 = arith.constant 0 : i32
    %c0_i32_1 = arith.constant 0 : i32
    return %c0_i32, %c0_i32_0 : i32, i32
  }
  func.func @transform_6(%arg0: i32) -> (i32, i32) {
    %c0_i32 = arith.constant 0 : i32
    %c0_i32_0 = arith.constant 0 : i32
    %c0_i32_1 = arith.constant 0 : i32
    return %c0_i32, %c0_i32_0 : i32, i32
  }
}

</mosaic_0001>

<llo_original>
// kernel: tpu_custom_call.1
$region0: #{tpu_custom_call.1}
  #allocation0 [shape = 'u32[]', space=smem, size = 0x4, offset = 0x4, fixed_abs, tag = 'smem constant byte address 0x4 - core index']
  #allocation1 [shape = 'u32[144,128]{1,0:T(1,128)}', space=vmem, size = 0x12000, scoped, tag = 'internal scratch']
  %s0 = inlined_call_operand.hbm [shape: bf16[128,128], index: 0, kind: input, shape index: {}]
  %s1 = inlined_call_operand.hbm [shape: bf16[128,128], index: 1, kind: input, shape index: {}]
  %s2 = inlined_call_operand.hbm [shape: bf16[128,128], index: 2, kind: input, shape index: {}]
  %s3 = inlined_call_operand.hbm [shape: bf16[128,128], index: 3, kind: input, shape index: {}]
  %s4 = inlined_call_operand.hbm [shape: f32[1,128], index: 4, kind: input, shape index: {}]
  %s5 = inlined_call_operand.hbm [shape: f32[1,128], index: 5, kind: input, shape index: {}]
  %s6 = inlined_call_operand.hbm [shape: f32[128,128], index: 6, kind: output, shape index: {}]
  %s7 = sld [smem:[#allocation0]]
  $region58: #{tpu_custom_call.1} parent=0
    _
  %s9 = ssub.s32 1, %s7
  %s10 = scalar_select 0, %s9, %s7
  $region1: #{tpu_custom_call.1} parent=0
    #allocation2 [shape = 'u8[32768]{0}', space=vmem, size = 0x8000, scoped, tag = 'input window, operand 0, single buffered']
    #allocation3 [shape = 's32[1]{0}', space=sflag, size = 0x4, scoped, tag = 'scoped memory for tpu_custom_call.1']
    #allocation4 [shape = 's32[1]{0}', space=sflag, size = 0x4, scoped, tag = 'scoped memory for tpu_custom_call.1']
    #allocation5 [shape = 'u8[32768]{0}', space=vmem, size = 0x8000, scoped, tag = 'input window, operand 1, single buffered']
    #allocation6 [shape = 's32[1]{0}', space=sflag, size = 0x4, scoped, tag = 'scoped memory for tpu_custom_call.1']
    #allocation7 [shape = 'u8[32768]{0}', space=vmem, size = 0x8000, scoped, tag = 'input window, operand 2, single buffered']
    #allocation8 [shape = 'u8[32768]{0}', space=vmem, size = 0x8000, scoped, tag = 'input window, operand 3, single buffered']
    #allocation9 [shape = 's32[1]{0}', space=sflag, size = 0x4, scoped, tag = 'scoped memory for tpu_custom_call.1']
    #allocation10 [shape = 'u8[512]{0}', space=vmem, size = 0x400, scoped, tag = 'input window, operand 4, single buffered']
    #allocation11 [shape = 'u8[512]{0}', space=vmem, size = 0x400, scoped, tag = 'input window, operand 5, single buffered']
    #allocation12 [shape = 's32[1]{0}', space=sflag, size = 0x4, scoped, tag = 'scoped memory for tpu_custom_call.1']
    #allocation13 [shape = 'u8[65536]{0}', space=vmem, size = 0x10000, scoped, tag = 'output window, operand 0, single buffered']
    %11 = vsyncpa [#allocation3], 0
    %12 = vsyncpa [#allocation6], 0
    %13 = vsyncpa [#allocation9], 0
    %14 = vsyncpa [#allocation12], 0
    %15 = vsyncpa [#allocation4], 0
    // Predicated region
    $region2: #{tpu_custom_call.1} parent=1 // pred_check
      _
    $region3: #{tpu_custom_call.1} parent=1 // pred_check_branch
      %17 = sbr.rel (0) target = $region5
    $region4: #{tpu_custom_call.1} parent=1 // pred_region
      %s19 = ssub.s32 1024, 1024
      %20 = vsyncadd [#allocation3], %s19
      %s21 = sshll.u32 [#allocation2], 4
      %s22 = int_to_ptr.vmem [resolvable:$true] %s21
      %27 = dma.hbm_to_vmem [thread:$0]  %s0, 1024, %s22, [#allocation3], 64, 64, 4
    $region5: #{tpu_custom_call.1} parent=1 // pred_fallthru
      _
    // Predicated region
    $region6: #{tpu_custom_call.1} parent=1 // pred_check
      _
    $region7: #{tpu_custom_call.1} parent=1 // pred_check_branch
      %29 = sbr.rel (0) target = $region9
    $region8: #{tpu_custom_call.1} parent=1 // pred_region
      %s31 = ssub.s32 1024, 1024
      %32 = vsyncadd [#allocation6], %s31
      %s33 = sshll.u32 [#allocation5], 4
      %s34 = int_to_ptr.vmem [resolvable:$true] %s33
      %39 = dma.hbm_to_vmem [thread:$0]  %s1, 1024, %s34, [#allocation6], 64, 64, 4
    $region9: #{tpu_custom_call.1} parent=1 // pred_fallthru
      _
    // Predicated region
    $region10: #{tpu_custom_call.1} parent=1 // pred_check
      _
    $region11: #{tpu_custom_call.1} parent=1 // pred_check_branch
      %41 = sbr.rel (0) target = $region13
    $region12: #{tpu_custom_call.1} parent=1 // pred_region
      %s43 = ssub.s32 1024, 1024
      %44 = vsyncadd [#allocation6], %s43
      %s45 = sshll.u32 [#allocation7], 4
      %s46 = int_to_ptr.vmem [resolvable:$true] %s45
      %51 = dma.hbm_to_vmem [thread:$0]  %s2, 1024, %s46, [#allocation6], 64, 64, 4
    $region13: #{tpu_custom_call.1} parent=1 // pred_fallthru
      _
    // Predicated region
    $region14: #{tpu_custom_call.1} parent=1 // pred_check
      _
    $region15: #{tpu_custom_call.1} parent=1 // pred_check_branch
      %53 = sbr.rel (0) target = $region17
    $region16: #{tpu_custom_call.1} parent=1 // pred_region
      %s55 = ssub.s32 1024, 1024
      %56 = vsyncadd [#allocation9], %s55
      %s57 = sshll.u32 [#allocation8], 4
      %s58 = int_to_ptr.vmem [resolvable:$true] %s57
      %63 = dma.hbm_to_vmem [thread:$0]  %s3, 1024, %s58, [#allocation9], 64, 64, 4
    $region17: #{tpu_custom_call.1} parent=1 // pred_fallthru
      _
    // Predicated region
    $region18: #{tpu_custom_call.1} parent=1 // pred_check
      _
    $region19: #{tpu_custom_call.1} parent=1 // pred_check_branch
      %65 = sbr.rel (0) target = $region21
    $region20: #{tpu_custom_call.1} parent=1 // pred_region
      %s67 = ssub.s32 16, 16
      %68 = vsyncadd [#allocation9], %s67
      %s70 = sshll.u32 [#allocation10], 4
      %s71 = int_to_ptr.vmem [resolvable:$true] %s70
      %73 = dma.hbm_to_vmem [thread:$0]  %s4, 16, %s71, [#allocation9]
    $region21: #{tpu_custom_call.1} parent=1 // pred_fallthru
      _
    // Predicated region
    $region22: #{tpu_custom_call.1} parent=1 // pred_check
      _
    $region23: #{tpu_custom_call.1} parent=1 // pred_check_branch
      %75 = sbr.rel (0) target = $region25
    $region24: #{tpu_custom_call.1} parent=1 // pred_region
      %s77 = ssub.s32 16, 16
      %78 = vsyncadd [#allocation12], %s77
      %s80 = sshll.u32 [#allocation11], 4
      %s81 = int_to_ptr.vmem [resolvable:$true] %s80
      %83 = dma.hbm_to_vmem [thread:$0]  %s5, 16, %s81, [#allocation12]
    $region25: #{tpu_custom_call.1} parent=1 // pred_fallthru
      _
    // Predicated region
    $region26: #{tpu_custom_call.1} parent=1 // pred_check
      _
    $region27: #{tpu_custom_call.1} parent=1 // pred_check_branch
      %85 = sbr.rel (0) target = $region29
    $region28: #{tpu_custom_call.1} parent=1 // pred_region
      %86 = dma.done [#allocation3], 1024
    $region29: #{tpu_custom_call.1} parent=1 // pred_fallthru
      _
    // Predicated region
    $region30: #{tpu_custom_call.1} parent=1 // pred_check
      _
    $region31: #{tpu_custom_call.1} parent=1 // pred_check_branch
      %88 = sbr.rel (0) target = $region33
    $region32: #{tpu_custom_call.1} parent=1 // pred_region
      %89 = dma.done [#allocation6], 1024
    $region33: #{tpu_custom_call.1} parent=1 // pred_fallthru
      _
    // Predicated region
    $region34: #{tpu_custom_call.1} parent=1 // pred_check
      _
    $region35: #{tpu_custom_call.1} parent=1 // pred_check_branch
      %91 = sbr.rel (0) target = $region37
    $region36: #{tpu_custom_call.1} parent=1 // pred_region
      %92 = dma.done [#allocation6], 1024
    $region37: #{tpu_custom_call.1} parent=1 // pred_fallthru
      _
    // Predicated region
    $region38: #{tpu_custom_call.1} parent=1 // pred_check
      _
    $region39: #{tpu_custom_call.1} parent=1 // pred_check_branch
      %94 = sbr.rel (0) target = $region41
    $region40: #{tpu_custom_call.1} parent=1 // pred_region
      %95 = dma.done [#allocation9], 1024
    $region41: #{tpu_custom_call.1} parent=1 // pred_fallthru
      _
    // Predicated region
    $region42: #{tpu_custom_call.1} parent=1 // pred_check
      _
    $region43: #{tpu_custom_call.1} parent=1 // pred_check_branch
      %97 = sbr.rel (0) target = $region45
    $region44: #{tpu_custom_call.1} parent=1 // pred_region
      %98 = dma.done [#allocation9], 16
    $region45: #{tpu_custom_call.1} parent=1 // pred_fallthru
      _
    // Predicated region
    $region46: #{tpu_custom_call.1} parent=1 // pred_check
      _
    $region47: #{tpu_custom_call.1} parent=1 // pred_check_branch
      %100 = sbr.rel (0) target = $region49
    $region48: #{tpu_custom_call.1} parent=1 // pred_region
      %101 = dma.done [#allocation12], 16
    $region49: #{tpu_custom_call.1} parent=1 // pred_fallthru
      _
    %v103 = vld [vmem:[#allocation5] sm:$0xf]
    %v104 = vld [vmem:[#allocation5 + $0x4] sm:$0xf]
    %v105 = vld [vmem:[#allocation5 + $0x8] sm:$0xf]
    %v106 = vld [vmem:[#allocation5 + $0xc] sm:$0xf]
    %v107 = vld [vmem:[#allocation5 + $0x10] sm:$0xf]
    %v108 = vld [vmem:[#allocation5 + $0x14] sm:$0xf]
    %v109 = vld [vmem:[#allocation5 + $0x18] sm:$0xf]
    %v110 = vld [vmem:[#allocation5 + $0x1c] sm:$0xf]
    %v111 = vld [vmem:[#allocation5 + $0x20] sm:$0xf]
    %v112 = vld [vmem:[#allocation5 + $0x24] sm:$0xf]
    %v113 = vld [vmem:[#allocation5 + $0x28] sm:$0xf]
    %v114 = vld [vmem:[#allocation5 + $0x2c] sm:$0xf]
    %v115 = vld [vmem:[#allocation5 + $0x30] sm:$0xf]
    %v116 = vld [vmem:[#allocation5 + $0x34] sm:$0xf]
    %v117 = vld [vmem:[#allocation5 + $0x38] sm:$0xf]
    %v118 = vld [vmem:[#allocation5 + $0x3c] sm:$0xf]
    %v119 = vld [vmem:[#allocation2] sm:$0xf]
    %v120 = vld [vmem:[#allocation2 + $0x4] sm:$0xf]
    %v121 = vld [vmem:[#allocation2 + $0x8] sm:$0xf]
    %v122 = vld [vmem:[#allocation2 + $0xc] sm:$0xf]
    %v123 = vld [vmem:[#allocation2 + $0x10] sm:$0xf]
    %v124 = vld [vmem:[#allocation2 + $0x14] sm:$0xf]
    %v125 = vld [vmem:[#allocation2 + $0x18] sm:$0xf]
    %v126 = vld [vmem:[#allocation2 + $0x1c] sm:$0xf]
    %v127 = vld [vmem:[#allocation2 + $0x20] sm:$0xf]
    %v128 = vld [vmem:[#allocation2 + $0x24] sm:$0xf]
    %v129 = vld [vmem:[#allocation2 + $0x28] sm:$0xf]
    %v130 = vld [vmem:[#allocation2 + $0x2c] sm:$0xf]
    %v131 = vld [vmem:[#allocation2 + $0x30] sm:$0xf]
    %v132 = vld [vmem:[#allocation2 + $0x34] sm:$0xf]
    %v133 = vld [vmem:[#allocation2 + $0x38] sm:$0xf]
    %v134 = vld [vmem:[#allocation2 + $0x3c] sm:$0xf]
    %v135 = vld [vmem:[#allocation7] sm:$0xf]
    %v136 = vld [vmem:[#allocation7 + $0x4] sm:$0xf]
    %v137 = vld [vmem:[#allocation7 + $0x8] sm:$0xf]
    %v138 = vld [vmem:[#allocation7 + $0xc] sm:$0xf]
    %v139 = vld [vmem:[#allocation7 + $0x10] sm:$0xf]
    %v140 = vld [vmem:[#allocation7 + $0x14] sm:$0xf]
    %v141 = vld [vmem:[#allocation7 + $0x18] sm:$0xf]
    %v142 = vld [vmem:[#allocation7 + $0x1c] sm:$0xf]
    %v143 = vld [vmem:[#allocation7 + $0x20] sm:$0xf]
    %v144 = vld [vmem:[#allocation7 + $0x24] sm:$0xf]
    %v145 = vld [vmem:[#allocation7 + $0x28] sm:$0xf]
    %v146 = vld [vmem:[#allocation7 + $0x2c] sm:$0xf]
    %v147 = vld [vmem:[#allocation7 + $0x30] sm:$0xf]
    %v148 = vld [vmem:[#allocation7 + $0x34] sm:$0xf]
    %v149 = vld [vmem:[#allocation7 + $0x38] sm:$0xf]
    %v150 = vld [vmem:[#allocation7 + $0x3c] sm:$0xf]
    %v167 = vunpack.c.l.b16 %v119
    %v168 = vunpack.c.l.b16 %v120
    %v169 = vunpack.c.l.b16 %v121
    %v170 = vunpack.c.l.b16 %v122
    %v171 = vunpack.c.l.b16 %v123
    %v172 = vunpack.c.l.b16 %v124
    %v173 = vunpack.c.l.b16 %v125
    %v174 = vunpack.c.l.b16 %v126
    %v175 = vunpack.c.l.b16 %v127
    %v176 = vunpack.c.l.b16 %v128
    %v177 = vunpack.c.l.b16 %v129
    %v178 = vunpack.c.l.b16 %v130
    %v179 = vunpack.c.l.b16 %v131
    %v180 = vunpack.c.l.b16 %v132
    %v181 = vunpack.c.l.b16 %v133
    %v182 = vunpack.c.l.b16 %v134
    %v183 = vpack.c.b16 %v168, %v167
    %v184 = vpack.c.b16 %v170, %v169
    %v185 = vpack.c.b16 %v172, %v171
    %v186 = vpack.c.b16 %v174, %v173
    %v187 = vpack.c.b16 %v176, %v175
    %v188 = vpack.c.b16 %v178, %v177
    %v189 = vpack.c.b16 %v180, %v179
    %v190 = vpack.c.b16 %v182, %v181
    %v215 = vunpack.c.l.b16 %v135
    %v216 = vunpack.c.l.b16 %v136
    %v217 = vunpack.c.l.b16 %v137
    %v218 = vunpack.c.l.b16 %v138
    %v219 = vunpack.c.l.b16 %v139
    %v220 = vunpack.c.l.b16 %v140
    %v221 = vunpack.c.l.b16 %v141
    %v222 = vunpack.c.l.b16 %v142
    %v223 = vunpack.c.l.b16 %v143
    %v224 = vunpack.c.l.b16 %v144
    %v225 = vunpack.c.l.b16 %v145
    %v226 = vunpack.c.l.b16 %v146
    %v227 = vunpack.c.l.b16 %v147
    %v228 = vunpack.c.l.b16 %v148
    %v229 = vunpack.c.l.b16 %v149
    %v230 = vunpack.c.l.b16 %v150
    %v231 = vpack.c.b16 %v216, %v215
    %v232 = vpack.c.b16 %v218, %v217
    %v233 = vpack.c.b16 %v220, %v219
    %v234 = vpack.c.b16 %v222, %v221
    %v235 = vpack.c.b16 %v224, %v223
    %v236 = vpack.c.b16 %v226, %v225
    %v237 = vpack.c.b16 %v228, %v227
    %v238 = vpack.c.b16 %v230, %v229
    %247 = vmatprep.subr.bf16.mxu0 0
    %248 = vmatpush1.bf16.msra.mxu0 %v231
    %249 = vmatprep.subr.bf16.mxu0 0
    %250 = vmatpush1.bf16.msra.mxu0 %v232
    %251 = vmatprep.subr.bf16.mxu0 0
    %252 = vmatpush1.bf16.msra.mxu0 %v233
    %253 = vmatprep.subr.bf16.mxu0 0
    %254 = vmatpush1.bf16.msra.mxu0 %v234
    %255 = vmatprep.subr.bf16.mxu0 0
    %256 = vmatpush1.bf16.msra.mxu0 %v235
    %257 = vmatprep.subr.bf16.mxu0 0
    %258 = vmatpush1.bf16.msra.mxu0 %v236
    %259 = vmatprep.subr.bf16.mxu0 0
    %260 = vmatpush1.bf16.msra.mxu0 %v237
    %261 = vmatprep.subr.bf16.mxu0 0
    %262 = vmatpush1.bf16.msra.mxu0 %v238
    %263 = vmatprep.subr.bf16.mxu0 0
    %264 = vmatpush1.bf16.msra.mxu0 0
    %265 = vmatprep.subr.bf16.mxu0 0
    %266 = vmatpush1.bf16.msra.mxu0 0
    %267 = vmatprep.subr.bf16.mxu0 0
    %268 = vmatpush1.bf16.msra.mxu0 0
    %269 = vmatprep.subr.bf16.mxu0 0
    %270 = vmatpush1.bf16.msra.mxu0 0
    %271 = vmatprep.subr.bf16.mxu0 0
    %272 = vmatpush1.bf16.msra.mxu0 0
    %273 = vmatprep.subr.bf16.mxu0 0
    %274 = vmatpush1.bf16.msra.mxu0 0
    %275 = vmatprep.subr.bf16.mxu0 0
    %276 = vmatpush1.bf16.msra.mxu0 0
    %277 = vmatprep.subr.bf16.mxu0 0
    %278 = vmatpush1.bf16.msra.mxu0 0
    %279 = vmatprep.mubr.bf16.mxu0 0
    %280 = vmatmul.mubr.bf16.gmra.mrb[0].mxu0 %v183
    %v281 = vpop.f32.mrb[0].mxu0
    %v282 = vadd.f32 0.0, %v281
    %v283 = vpop.f32.mrb[0].mxu0
    %v284 = vpop.f32.mrb[0].mxu0
    %v285 = vadd.f32 0.0, %v284
    %v286 = vpop.f32.mrb[0].mxu0
    %287 = vmatprep.mubr.bf16.mxu0 0
    %288 = vmatmul.mubr.bf16.gmra.mrb[0].mxu0 %v184
    %v289 = vpop.f32.mrb[0].mxu0
    %v290 = vadd.f32 0.0, %v289
    %v291 = vpop.f32.mrb[0].mxu0
    %v292 = vpop.f32.mrb[0].mxu0
    %v293 = vadd.f32 0.0, %v292
    %v294 = vpop.f32.mrb[0].mxu0
    %295 = vmatprep.mubr.bf16.mxu0 0
    %296 = vmatmul.mubr.bf16.gmra.mrb[0].mxu0 %v185
    %v297 = vpop.f32.mrb[0].mxu0
    %v298 = vadd.f32 0.0, %v297
    %v299 = vpop.f32.mrb[0].mxu0
    %v300 = vpop.f32.mrb[0].mxu0
    %v301 = vadd.f32 0.0, %v300
    %v302 = vpop.f32.mrb[0].mxu0
    %303 = vmatprep.mubr.bf16.mxu0 0
    %304 = vmatmul.mubr.bf16.gmra.mrb[0].mxu0 %v186
    %v305 = vpop.f32.mrb[0].mxu0
    %v306 = vadd.f32 0.0, %v305
    %v307 = vpop.f32.mrb[0].mxu0
    %v308 = vpop.f32.mrb[0].mxu0
    %v309 = vadd.f32 0.0, %v308
    %v310 = vpop.f32.mrb[0].mxu0
    %311 = vmatprep.mubr.bf16.mxu0 0
    %312 = vmatmul.mubr.bf16.gmra.mrb[0].mxu0 %v187
    %v313 = vpop.f32.mrb[0].mxu0
    %v314 = vadd.f32 0.0, %v313
    %v315 = vpop.f32.mrb[0].mxu0
    %v316 = vpop.f32.mrb[0].mxu0
    %v317 = vadd.f32 0.0, %v316
    %v318 = vpop.f32.mrb[0].mxu0
    %319 = vmatprep.mubr.bf16.mxu0 0
    %320 = vmatmul.mubr.bf16.gmra.mrb[0].mxu0 %v188
    %v321 = vpop.f32.mrb[0].mxu0
    %v322 = vadd.f32 0.0, %v321
    %v323 = vpop.f32.mrb[0].mxu0
    %v324 = vpop.f32.mrb[0].mxu0
    %v325 = vadd.f32 0.0, %v324
    %v326 = vpop.f32.mrb[0].mxu0
    %327 = vmatprep.mubr.bf16.mxu0 0
    %328 = vmatmul.mubr.bf16.gmra.mrb[0].mxu0 %v189
    %v329 = vpop.f32.mrb[0].mxu0
    %v330 = vadd.f32 0.0, %v329
    %v331 = vpop.f32.mrb[0].mxu0
    %v332 = vpop.f32.mrb[0].mxu0
    %v333 = vadd.f32 0.0, %v332
    %v334 = vpop.f32.mrb[0].mxu0
    %335 = vmatprep.mubr.bf16.mxu0 0
    %336 = vmatmul.mubr.bf16.gmra.mrb[0].mxu0 %v190
    %v337 = vpop.f32.mrb[0].mxu0
    %v338 = vadd.f32 0.0, %v337
    %v339 = vpop.f32.mrb[0].mxu0
    %v340 = vpop.f32.mrb[0].mxu0
    %v341 = vadd.f32 0.0, %v340
    %v342 = vpop.f32.mrb[0].mxu0
    %343 = vdwg.mxu0
    %v344 = vpack.c.bf16 %v285, %v282
    %v345 = vpack.c.bf16 %v293, %v290
    %v346 = vpack.c.bf16 %v301, %v298
    %v347 = vpack.c.bf16 %v309, %v306
    %v348 = vpack.c.bf16 %v317, %v314
    %v349 = vpack.c.bf16 %v325, %v322
    %v350 = vpack.c.bf16 %v333, %v330
    %v351 = vpack.c.bf16 %v341, %v338
    %v352 = vld [vmem:[#allocation10] sm:$0x1]
    %v354 = vlaneseq
    %v355 = vshrl.u32 %v354, 7
    %v356 = vsub.s32 0, %v355
    %v357 = vrot.slane %v352, %v356
    %v375 = vunpack.c.l.b16 %v103
    %v376 = vunpack.c.l.b16 %v104
    %v377 = vunpack.c.l.b16 %v105
    %v378 = vunpack.c.l.b16 %v106
    %v379 = vunpack.c.l.b16 %v107
    %v380 = vunpack.c.l.b16 %v108
    %v381 = vunpack.c.l.b16 %v109
    %v382 = vunpack.c.l.b16 %v110
    %v383 = vunpack.c.l.b16 %v111
    %v384 = vunpack.c.l.b16 %v112
    %v385 = vunpack.c.l.b16 %v113
    %v386 = vunpack.c.l.b16 %v114
    %v387 = vunpack.c.l.b16 %v115
    %v388 = vunpack.c.l.b16 %v116
    %v389 = vunpack.c.l.b16 %v117
    %v390 = vunpack.c.l.b16 %v118
    %v391 = vpack.c.b16 %v376, %v375
    %v392 = vpack.c.b16 %v378, %v377
    %v393 = vpack.c.b16 %v380, %v379
    %v394 = vpack.c.b16 %v382, %v381
    %v395 = vpack.c.b16 %v384, %v383
    %v396 = vpack.c.b16 %v386, %v385
    %v397 = vpack.c.b16 %v388, %v387
    %v398 = vpack.c.b16 %v390, %v389
    %407 = vmatprep.subr.bf16.mxu0 0
    %408 = vmatpush1.bf16.msra.mxu0 %v344
    %409 = vmatprep.subr.bf16.mxu0 0
    %410 = vmatpush1.bf16.msra.mxu0 %v345
    %411 = vmatprep.subr.bf16.mxu0 0
    %412 = vmatpush1.bf16.msra.mxu0 %v346
    %413 = vmatprep.subr.bf16.mxu0 0
    %414 = vmatpush1.bf16.msra.mxu0 %v347
    %415 = vmatprep.subr.bf16.mxu0 0
    %416 = vmatpush1.bf16.msra.mxu0 %v348
    %417 = vmatprep.subr.bf16.mxu0 0
    %418 = vmatpush1.bf16.msra.mxu0 %v349
    %419 = vmatprep.subr.bf16.mxu0 0
    %420 = vmatpush1.bf16.msra.mxu0 %v350
    %421 = vmatprep.subr.bf16.mxu0 0
    %422 = vmatpush1.bf16.msra.mxu0 %v351
    %423 = vmatprep.subr.bf16.mxu0 0
    %424 = vmatpush1.bf16.msra.mxu0 0
    %425 = vmatprep.subr.bf16.mxu0 0
    %426 = vmatpush1.bf16.msra.mxu0 0
    %427 = vmatprep.subr.bf16.mxu0 0
    %428 = vmatpush1.bf16.msra.mxu0 0
    %429 = vmatprep.subr.bf16.mxu0 0
    %430 = vmatpush1.bf16.msra.mxu0 0
    %431 = vmatprep.subr.bf16.mxu0 0
    %432 = vmatpush1.bf16.msra.mxu0 0
    %433 = vmatprep.subr.bf16.mxu0 0
    %434 = vmatpush1.bf16.msra.mxu0 0
    %435 = vmatprep.subr.bf16.mxu0 0
    %436 = vmatpush1.bf16.msra.mxu0 0
    %437 = vmatprep.subr.bf16.mxu0 0
    %438 = vmatpush1.bf16.msra.mxu0 0
    %439 = vmatprep.mubr.bf16.mxu0 0
    %440 = vmatmul.mubr.bf16.gmra.mrb[0].mxu0 %v391
    %v441 = vpop.f32.mrb[0].mxu0
    %v442 = vadd.f32 %v357, %v441
    %v443 = vpop.f32.mrb[0].mxu0
    %v444 = vpop.f32.mrb[0].mxu0
    %v445 = vadd.f32 %v357, %v444
    %v446 = vpop.f32.mrb[0].mxu0
    %447 = vmatprep.mubr.bf16.mxu0 0
    %448 = vmatmul.mubr.bf16.gmra.mrb[0].mxu0 %v392
    %v449 = vpop.f32.mrb[0].mxu0
    %v450 = vadd.f32 %v357, %v449
    %v451 = vpop.f32.mrb[0].mxu0
    %v452 = vpop.f32.mrb[0].mxu0
    %v453 = vadd.f32 %v357, %v452
    %v454 = vpop.f32.mrb[0].mxu0
    %455 = vmatprep.mubr.bf16.mxu0 0
    %456 = vmatmul.mubr.bf16.gmra.mrb[0].mxu0 %v393
    %v457 = vpop.f32.mrb[0].mxu0
    %v458 = vadd.f32 %v357, %v457
    %v459 = vpop.f32.mrb[0].mxu0
    %v460 = vpop.f32.mrb[0].mxu0
    %v461 = vadd.f32 %v357, %v460
    %v462 = vpop.f32.mrb[0].mxu0
    %463 = vmatprep.mubr.bf16.mxu0 0
    %464 = vmatmul.mubr.bf16.gmra.mrb[0].mxu0 %v394
    %v465 = vpop.f32.mrb[0].mxu0
    %v466 = vadd.f32 %v357, %v465
    %v467 = vpop.f32.mrb[0].mxu0
    %v468 = vpop.f32.mrb[0].mxu0
    %v469 = vadd.f32 %v357, %v468
    %v470 = vpop.f32.mrb[0].mxu0
    %471 = vmatprep.mubr.bf16.mxu0 0
    %472 = vmatmul.mubr.bf16.gmra.mrb[0].mxu0 %v395
    %v473 = vpop.f32.mrb[0].mxu0
    %v474 = vadd.f32 %v357, %v473
    %v475 = vpop.f32.mrb[0].mxu0
    %v476 = vpop.f32.mrb[0].mxu0
    %v477 = vadd.f32 %v357, %v476
    %v478 = vpop.f32.mrb[0].mxu0
    %479 = vmatprep.mubr.bf16.mxu0 0
    %480 = vmatmul.mubr.bf16.gmra.mrb[0].mxu0 %v396
    %v481 = vpop.f32.mrb[0].mxu0
    %v482 = vadd.f32 %v357, %v481
    %v483 = vpop.f32.mrb[0].mxu0
    %v484 = vpop.f32.mrb[0].mxu0
    %v485 = vadd.f32 %v357, %v484
    %v486 = vpop.f32.mrb[0].mxu0
    %487 = vmatprep.mubr.bf16.mxu0 0
    %488 = vmatmul.mubr.bf16.gmra.mrb[0].mxu0 %v397
    %v489 = vpop.f32.mrb[0].mxu0
    %v490 = vadd.f32 %v357, %v489
    %v491 = vpop.f32.mrb[0].mxu0
    %v492 = vpop.f32.mrb[0].mxu0
    %v493 = vadd.f32 %v357, %v492
    %v494 = vpop.f32.mrb[0].mxu0
    %495 = vmatprep.mubr.bf16.mxu0 0
    %496 = vmatmul.mubr.bf16.gmra.mrb[0].mxu0 %v398
    %v497 = vpop.f32.mrb[0].mxu0
    %v498 = vadd.f32 %v357, %v497
    %v499 = vpop.f32.mrb[0].mxu0
    %v500 = vpop.f32.mrb[0].mxu0
    %v501 = vadd.f32 %v357, %v500
    %v502 = vpop.f32.mrb[0].mxu0
    %503 = vdwg.mxu0
    %v504 = vmax.f32 %v442, 0.0
    %v505 = vmax.f32 %v445, 0.0
    %v506 = vmax.f32 %v450, 0.0
    %v507 = vmax.f32 %v453, 0.0
    %v508 = vmax.f32 %v458, 0.0
    %v509 = vmax.f32 %v461, 0.0
    %v510 = vmax.f32 %v466, 0.0
    %v511 = vmax.f32 %v469, 0.0
    %v512 = vmax.f32 %v474, 0.0
    %v513 = vmax.f32 %v477, 0.0
    %v514 = vmax.f32 %v482, 0.0
    %v515 = vmax.f32 %v485, 0.0
    %v516 = vmax.f32 %v490, 0.0
    %v517 = vmax.f32 %v493, 0.0
    %v518 = vmax.f32 %v498, 0.0
    %v519 = vmax.f32 %v501, 0.0
    %v520 = vpack.c.bf16 %v505, %v504
    %v521 = vpack.c.bf16 %v507, %v506
    %v522 = vpack.c.bf16 %v509, %v508
    %v523 = vpack.c.bf16 %v511, %v510
    %v524 = vpack.c.bf16 %v513, %v512
    %v525 = vpack.c.bf16 %v515, %v514
    %v526 = vpack.c.bf16 %v517, %v516
    %v527 = vpack.c.bf16 %v519, %v518
    %v528 = vld [vmem:[#allocation8] sm:$0xf]
    %v529 = vld [vmem:[#allocation8 + $0x4] sm:$0xf]
    %v530 = vld [vmem:[#allocation8 + $0x8] sm:$0xf]
    %v531 = vld [vmem:[#allocation8 + $0xc] sm:$0xf]
    %v532 = vld [vmem:[#allocation8 + $0x10] sm:$0xf]
    %v533 = vld [vmem:[#allocation8 + $0x14] sm:$0xf]
    %v534 = vld [vmem:[#allocation8 + $0x18] sm:$0xf]
    %v535 = vld [vmem:[#allocation8 + $0x1c] sm:$0xf]
    %v536 = vld [vmem:[#allocation8 + $0x20] sm:$0xf]
    %v537 = vld [vmem:[#allocation8 + $0x24] sm:$0xf]
    %v538 = vld [vmem:[#allocation8 + $0x28] sm:$0xf]
    %v539 = vld [vmem:[#allocation8 + $0x2c] sm:$0xf]
    %v540 = vld [vmem:[#allocation8 + $0x30] sm:$0xf]
    %v541 = vld [vmem:[#allocation8 + $0x34] sm:$0xf]
    %v542 = vld [vmem:[#allocation8 + $0x38] sm:$0xf]
    %v543 = vld [vmem:[#allocation8 + $0x3c] sm:$0xf]
    %v560 = vunpack.c.l.b16 %v528
    %v561 = vunpack.c.l.b16 %v529
    %v562 = vunpack.c.l.b16 %v530
    %v563 = vunpack.c.l.b16 %v531
    %v564 = vunpack.c.l.b16 %v532
    %v565 = vunpack.c.l.b16 %v533
    %v566 = vunpack.c.l.b16 %v534
    %v567 = vunpack.c.l.b16 %v535
    %v568 = vunpack.c.l.b16 %v536
    %v569 = vunpack.c.l.b16 %v537
    %v570 = vunpack.c.l.b16 %v538
    %v571 = vunpack.c.l.b16 %v539
    %v572 = vunpack.c.l.b16 %v540
    %v573 = vunpack.c.l.b16 %v541
    %v574 = vunpack.c.l.b16 %v542
    %v575 = vunpack.c.l.b16 %v543
    %v576 = vpack.c.b16 %v561, %v560
    %v577 = vpack.c.b16 %v563, %v562
    %v578 = vpack.c.b16 %v565, %v564
    %v579 = vpack.c.b16 %v567, %v566
    %v580 = vpack.c.b16 %v569, %v568
    %v581 = vpack.c.b16 %v571, %v570
    %v582 = vpack.c.b16 %v573, %v572
    %v583 = vpack.c.b16 %v575, %v574
    %592 = vmatprep.subr.bf16.mxu0 0
    %593 = vmatpush1.bf16.msra.mxu0 %v576
    %594 = vmatprep.subr.bf16.mxu0 0
    %595 = vmatpush1.bf16.msra.mxu0 %v577
    %596 = vmatprep.subr.bf16.mxu0 0
    %597 = vmatpush1.bf16.msra.mxu0 %v578
    %598 = vmatprep.subr.bf16.mxu0 0
    %599 = vmatpush1.bf16.msra.mxu0 %v579
    %600 = vmatprep.subr.bf16.mxu0 0
    %601 = vmatpush1.bf16.msra.mxu0 %v580
    %602 = vmatprep.subr.bf16.mxu0 0
    %603 = vmatpush1.bf16.msra.mxu0 %v581
    %604 = vmatprep.subr.bf16.mxu0 0
    %605 = vmatpush1.bf16.msra.mxu0 %v582
    %606 = vmatprep.subr.bf16.mxu0 0
    %607 = vmatpush1.bf16.msra.mxu0 %v583
    %608 = vmatprep.subr.bf16.mxu0 0
    %609 = vmatpush1.bf16.msra.mxu0 0
    %610 = vmatprep.subr.bf16.mxu0 0
    %611 = vmatpush1.bf16.msra.mxu0 0
    %612 = vmatprep.subr.bf16.mxu0 0
    %613 = vmatpush1.bf16.msra.mxu0 0
    %614 = vmatprep.subr.bf16.mxu0 0
    %615 = vmatpush1.bf16.msra.mxu0 0
    %616 = vmatprep.subr.bf16.mxu0 0
    %617 = vmatpush1.bf16.msra.mxu0 0
    %618 = vmatprep.subr.bf16.mxu0 0
    %619 = vmatpush1.bf16.msra.mxu0 0
    %620 = vmatprep.subr.bf16.mxu0 0
    %621 = vmatpush1.bf16.msra.mxu0 0
    %622 = vmatprep.subr.bf16.mxu0 0
    %623 = vmatpush1.bf16.msra.mxu0 0
    %624 = vmatprep.mubr.bf16.mxu0 0
    %625 = vmatmul.mubr.bf16.gmra.mrb[0].mxu0 %v520
    %v626 = vpop.f32.mrb[0].mxu0
    %v627 = vadd.f32 0.0, %v626
    %v628 = vpop.f32.mrb[0].mxu0
    %v629 = vpop.f32.mrb[0].mxu0
    %v630 = vadd.f32 0.0, %v629
    %v631 = vpop.f32.mrb[0].mxu0
    %632 = vmatprep.mubr.bf16.mxu0 0
    %633 = vmatmul.mubr.bf16.gmra.mrb[0].mxu0 %v521
    %v634 = vpop.f32.mrb[0].mxu0
    %v635 = vadd.f32 0.0, %v634
    %v636 = vpop.f32.mrb[0].mxu0
    %v637 = vpop.f32.mrb[0].mxu0
    %v638 = vadd.f32 0.0, %v637
    %v639 = vpop.f32.mrb[0].mxu0
    %640 = vmatprep.mubr.bf16.mxu0 0
    %641 = vmatmul.mubr.bf16.gmra.mrb[0].mxu0 %v522
    %v642 = vpop.f32.mrb[0].mxu0
    %v643 = vadd.f32 0.0, %v642
    %v644 = vpop.f32.mrb[0].mxu0
    %v645 = vpop.f32.mrb[0].mxu0
    %v646 = vadd.f32 0.0, %v645
    %v647 = vpop.f32.mrb[0].mxu0
    %648 = vmatprep.mubr.bf16.mxu0 0
    %649 = vmatmul.mubr.bf16.gmra.mrb[0].mxu0 %v523
    %v650 = vpop.f32.mrb[0].mxu0
    %v651 = vadd.f32 0.0, %v650
    %v652 = vpop.f32.mrb[0].mxu0
    %v653 = vpop.f32.mrb[0].mxu0
    %v654 = vadd.f32 0.0, %v653
    %v655 = vpop.f32.mrb[0].mxu0
    %656 = vmatprep.mubr.bf16.mxu0 0
    %657 = vmatmul.mubr.bf16.gmra.mrb[0].mxu0 %v524
    %v658 = vpop.f32.mrb[0].mxu0
    %v659 = vadd.f32 0.0, %v658
    %v660 = vpop.f32.mrb[0].mxu0
    %v661 = vpop.f32.mrb[0].mxu0
    %v662 = vadd.f32 0.0, %v661
    %v663 = vpop.f32.mrb[0].mxu0
    %664 = vmatprep.mubr.bf16.mxu0 0
    %665 = vmatmul.mubr.bf16.gmra.mrb[0].mxu0 %v525
    %v666 = vpop.f32.mrb[0].mxu0
    %v667 = vadd.f32 0.0, %v666
    %v668 = vpop.f32.mrb[0].mxu0
    %v669 = vpop.f32.mrb[0].mxu0
    %v670 = vadd.f32 0.0, %v669
    %v671 = vpop.f32.mrb[0].mxu0
    %672 = vmatprep.mubr.bf16.mxu0 0
    %673 = vmatmul.mubr.bf16.gmra.mrb[0].mxu0 %v526
    %v674 = vpop.f32.mrb[0].mxu0
    %v675 = vadd.f32 0.0, %v674
    %v676 = vpop.f32.mrb[0].mxu0
    %v677 = vpop.f32.mrb[0].mxu0
    %v678 = vadd.f32 0.0, %v677
    %v679 = vpop.f32.mrb[0].mxu0
    %680 = vmatprep.mubr.bf16.mxu0 0
    %681 = vmatmul.mubr.bf16.gmra.mrb[0].mxu0 %v527
    %v682 = vpop.f32.mrb[0].mxu0
    %v683 = vadd.f32 0.0, %v682
    %v684 = vpop.f32.mrb[0].mxu0
    %v685 = vpop.f32.mrb[0].mxu0
    %v686 = vadd.f32 0.0, %v685
    %v687 = vpop.f32.mrb[0].mxu0
    %688 = vdwg.mxu0
    %v689 = vpack.c.bf16 %v630, %v627
    %v690 = vpack.c.bf16 %v638, %v635
    %v691 = vpack.c.bf16 %v646, %v643
    %v692 = vpack.c.bf16 %v654, %v651
    %v693 = vpack.c.bf16 %v662, %v659
    %v694 = vpack.c.bf16 %v670, %v667
    %v695 = vpack.c.bf16 %v678, %v675
    %v696 = vpack.c.bf16 %v686, %v683
    %v697 = vld [vmem:[#allocation11] sm:$0x1]
    %v699 = vlaneseq
    %v700 = vshrl.u32 %v699, 7
    %v701 = vsub.s32 0, %v700
    %v702 = vrot.slane %v697, %v701
    %704 = vmatprep.subr.bf16.mxu0 0
    %705 = vmatpush1.bf16.msra.mxu0 %v689
    %706 = vmatprep.subr.bf16.mxu0 0
    %707 = vmatpush1.bf16.msra.mxu0 %v690
    %708 = vmatprep.subr.bf16.mxu0 0
    %709 = vmatpush1.bf16.msra.mxu0 %v691
    %710 = vmatprep.subr.bf16.mxu0 0
    %711 = vmatpush1.bf16.msra.mxu0 %v692
    %712 = vmatprep.subr.bf16.mxu0 0
    %713 = vmatpush1.bf16.msra.mxu0 %v693
    %714 = vmatprep.subr.bf16.mxu0 0
    %715 = vmatpush1.bf16.msra.mxu0 %v694
    %716 = vmatprep.subr.bf16.mxu0 0
    %717 = vmatpush1.bf16.msra.mxu0 %v695
    %718 = vmatprep.subr.bf16.mxu0 0
    %719 = vmatpush1.bf16.msra.mxu0 %v696
    %720 = vmatprep.subr.bf16.mxu0 0
    %721 = vmatpush1.bf16.msra.mxu0 0
    %722 = vmatprep.subr.bf16.mxu0 0
    %723 = vmatpush1.bf16.msra.mxu0 0
    %724 = vmatprep.subr.bf16.mxu0 0
    %725 = vmatpush1.bf16.msra.mxu0 0
    %726 = vmatprep.subr.bf16.mxu0 0
    %727 = vmatpush1.bf16.msra.mxu0 0
    %728 = vmatprep.subr.bf16.mxu0 0
    %729 = vmatpush1.bf16.msra.mxu0 0
    %730 = vmatprep.subr.bf16.mxu0 0
    %731 = vmatpush1.bf16.msra.mxu0 0
    %732 = vmatprep.subr.bf16.mxu0 0
    %733 = vmatpush1.bf16.msra.mxu0 0
    %734 = vmatprep.subr.bf16.mxu0 0
    %735 = vmatpush1.bf16.msra.mxu0 0
    %736 = vmatprep.mubr.bf16.mxu0 0
    %737 = vmatmul.mubr.bf16.gmra.mrb[0].mxu0 %v391
    %v738 = vpop.f32.mrb[0].mxu0
    %v739 = vadd.f32 %v702, %v738
    %v740 = vpop.f32.mrb[0].mxu0
    %v741 = vpop.f32.mrb[0].mxu0
    %v742 = vadd.f32 %v702, %v741
    %v743 = vpop.f32.mrb[0].mxu0
    %744 = vmatprep.mubr.bf16.mxu0 0
    %745 = vmatmul.mubr.bf16.gmra.mrb[0].mxu0 %v392
    %v746 = vpop.f32.mrb[0].mxu0
    %v747 = vadd.f32 %v702, %v746
    %v748 = vpop.f32.mrb[0].mxu0
    %v749 = vpop.f32.mrb[0].mxu0
    %v750 = vadd.f32 %v702, %v749
    %v751 = vpop.f32.mrb[0].mxu0
    %752 = vmatprep.mubr.bf16.mxu0 0
    %753 = vmatmul.mubr.bf16.gmra.mrb[0].mxu0 %v393
    %v754 = vpop.f32.mrb[0].mxu0
    %v755 = vadd.f32 %v702, %v754
    %v756 = vpop.f32.mrb[0].mxu0
    %v757 = vpop.f32.mrb[0].mxu0
    %v758 = vadd.f32 %v702, %v757
    %v759 = vpop.f32.mrb[0].mxu0
    %760 = vmatprep.mubr.bf16.mxu0 0
    %761 = vmatmul.mubr.bf16.gmra.mrb[0].mxu0 %v394
    %v762 = vpop.f32.mrb[0].mxu0
    %v763 = vadd.f32 %v702, %v762
    %v764 = vpop.f32.mrb[0].mxu0
    %v765 = vpop.f32.mrb[0].mxu0
    %v766 = vadd.f32 %v702, %v765
    %v767 = vpop.f32.mrb[0].mxu0
    %768 = vmatprep.mubr.bf16.mxu0 0
    %769 = vmatmul.mubr.bf16.gmra.mrb[0].mxu0 %v395
    %v770 = vpop.f32.mrb[0].mxu0
    %v771 = vadd.f32 %v702, %v770
    %v772 = vpop.f32.mrb[0].mxu0
    %v773 = vpop.f32.mrb[0].mxu0
    %v774 = vadd.f32 %v702, %v773
    %v775 = vpop.f32.mrb[0].mxu0
    %776 = vmatprep.mubr.bf16.mxu0 0
    %777 = vmatmul.mubr.bf16.gmra.mrb[0].mxu0 %v396
    %v778 = vpop.f32.mrb[0].mxu0
    %v779 = vadd.f32 %v702, %v778
    %v780 = vpop.f32.mrb[0].mxu0
    %v781 = vpop.f32.mrb[0].mxu0
    %v782 = vadd.f32 %v702, %v781
    %v783 = vpop.f32.mrb[0].mxu0
    %784 = vmatprep.mubr.bf16.mxu0 0
    %785 = vmatmul.mubr.bf16.gmra.mrb[0].mxu0 %v397
    %v786 = vpop.f32.mrb[0].mxu0
    %v787 = vadd.f32 %v702, %v786
    %v788 = vpop.f32.mrb[0].mxu0
    %v789 = vpop.f32.mrb[0].mxu0
    %v790 = vadd.f32 %v702, %v789
    %v791 = vpop.f32.mrb[0].mxu0
    %792 = vmatprep.mubr.bf16.mxu0 0
    %793 = vmatmul.mubr.bf16.gmra.mrb[0].mxu0 %v398
    %v794 = vpop.f32.mrb[0].mxu0
    %v795 = vadd.f32 %v702, %v794
    %v796 = vpop.f32.mrb[0].mxu0
    %v797 = vpop.f32.mrb[0].mxu0
    %v798 = vadd.f32 %v702, %v797
    %v799 = vpop.f32.mrb[0].mxu0
    %800 = vdwg.mxu0
    %v801 = vlaneseq
    %v802 = vand.u32 %v801, 127
    %vm803 = vcmp.lt.s32.totalorder %v802, 8
    %v804 = vsel %vm803, %v739, -1e+30
    %v805 = vsel %vm803, %v742, -1e+30
    %v806 = vsel %vm803, %v747, -1e+30
    %v807 = vsel %vm803, %v750, -1e+30
    %v808 = vsel %vm803, %v755, -1e+30
    %v809 = vsel %vm803, %v758, -1e+30
    %v810 = vsel %vm803, %v763, -1e+30
    %v811 = vsel %vm803, %v766, -1e+30
    %v812 = vsel %vm803, %v771, -1e+30
    %v813 = vsel %vm803, %v774, -1e+30
    %v814 = vsel %vm803, %v779, -1e+30
    %v815 = vsel %vm803, %v782, -1e+30
    %v816 = vsel %vm803, %v787, -1e+30
    %v817 = vsel %vm803, %v790, -1e+30
    %v818 = vsel %vm803, %v795, -1e+30
    %v819 = vsel %vm803, %v798, -1e+30
    %820 = vmax.xlane.f32.xlu0 %v804
    %v821 = vpop.xlane.xlu0 %820
    %822 = vmax.xlane.f32.xlu0 %v805
    %v823 = vpop.xlane.xlu0 %822
    %824 = vmax.xlane.f32.xlu0 %v806
    %v825 = vpop.xlane.xlu0 %824
    %826 = vmax.xlane.f32.xlu0 %v807
    %v827 = vpop.xlane.xlu0 %826
    %828 = vmax.xlane.f32.xlu0 %v808
    %v829 = vpop.xlane.xlu0 %828
    %830 = vmax.xlane.f32.xlu0 %v809
    %v831 = vpop.xlane.xlu0 %830
    %832 = vmax.xlane.f32.xlu0 %v810
    %v833 = vpop.xlane.xlu0 %832
    %834 = vmax.xlane.f32.xlu0 %v811
    %v835 = vpop.xlane.xlu0 %834
    %836 = vmax.xlane.f32.xlu0 %v812
    %v837 = vpop.xlane.xlu0 %836
    %838 = vmax.xlane.f32.xlu0 %v813
    %v839 = vpop.xlane.xlu0 %838
    %840 = vmax.xlane.f32.xlu0 %v814
    %v841 = vpop.xlane.xlu0 %840
    %842 = vmax.xlane.f32.xlu0 %v815
    %v843 = vpop.xlane.xlu0 %842
    %844 = vmax.xlane.f32.xlu0 %v816
    %v845 = vpop.xlane.xlu0 %844
    %846 = vmax.xlane.f32.xlu0 %v817
    %v847 = vpop.xlane.xlu0 %846
    %848 = vmax.xlane.f32.xlu0 %v818
    %v849 = vpop.xlane.xlu0 %848
    %850 = vmax.xlane.f32.xlu0 %v819
    %v851 = vpop.xlane.xlu0 %850
    %v852 = vsub.f32 %v804, %v821
    %v853 = vsub.f32 %v805, %v823
    %v854 = vsub.f32 %v806, %v825
    %v855 = vsub.f32 %v807, %v827
    %v856 = vsub.f32 %v808, %v829
    %v857 = vsub.f32 %v809, %v831
    %v858 = vsub.f32 %v810, %v833
    %v859 = vsub.f32 %v811, %v835
    %v860 = vsub.f32 %v812, %v837
    %v861 = vsub.f32 %v813, %v839
    %v862 = vsub.f32 %v814, %v841
    %v863 = vsub.f32 %v815, %v843
    %v864 = vsub.f32 %v816, %v845
    %v865 = vsub.f32 %v817, %v847
    %v866 = vsub.f32 %v818, %v849
    %v867 = vsub.f32 %v819, %v851
    %v868 = vmul.f32 %v852, 1.442695
    %v869 = vpow.pop %v868
    %v870 = vmul.f32 %v853, 1.442695
    %v871 = vpow.pop %v870
    %v872 = vmul.f32 %v854, 1.442695
    %v873 = vpow.pop %v872
    %v874 = vmul.f32 %v855, 1.442695
    %v875 = vpow.pop %v874
    %v876 = vmul.f32 %v856, 1.442695
    %v877 = vpow.pop %v876
    %v878 = vmul.f32 %v857, 1.442695
    %v879 = vpow.pop %v878
    %v880 = vmul.f32 %v858, 1.442695
    %v881 = vpow.pop %v880
    %v882 = vmul.f32 %v859, 1.442695
    %v883 = vpow.pop %v882
    %v884 = vmul.f32 %v860, 1.442695
    %v885 = vpow.pop %v884
    %v886 = vmul.f32 %v861, 1.442695
    %v887 = vpow.pop %v886
    %v888 = vmul.f32 %v862, 1.442695
    %v889 = vpow.pop %v888
    %v890 = vmul.f32 %v863, 1.442695
    %v891 = vpow.pop %v890
    %v892 = vmul.f32 %v864, 1.442695
    %v893 = vpow.pop %v892
    %v894 = vmul.f32 %v865, 1.442695
    %v895 = vpow.pop %v894
    %v896 = vmul.f32 %v866, 1.442695
    %v897 = vpow.pop %v896
    %v898 = vmul.f32 %v867, 1.442695
    %v899 = vpow.pop %v898
    %900 = vadd.xlane.f32.xlu0 %v869
    %v901 = vpop.xlane.xlu0 %900
    %902 = vadd.xlane.f32.xlu0 %v871
    %v903 = vpop.xlane.xlu0 %902
    %904 = vadd.xlane.f32.xlu0 %v873
    %v905 = vpop.xlane.xlu0 %904
    %906 = vadd.xlane.f32.xlu0 %v875
    %v907 = vpop.xlane.xlu0 %906
    %908 = vadd.xlane.f32.xlu0 %v877
    %v909 = vpop.xlane.xlu0 %908
    %910 = vadd.xlane.f32.xlu0 %v879
    %v911 = vpop.xlane.xlu0 %910
    %912 = vadd.xlane.f32.xlu0 %v881
    %v913 = vpop.xlane.xlu0 %912
    %914 = vadd.xlane.f32.xlu0 %v883
    %v915 = vpop.xlane.xlu0 %914
    %916 = vadd.xlane.f32.xlu0 %v885
    %v917 = vpop.xlane.xlu0 %916
    %918 = vadd.xlane.f32.xlu0 %v887
    %v919 = vpop.xlane.xlu0 %918
    %920 = vadd.xlane.f32.xlu0 %v889
    %v921 = vpop.xlane.xlu0 %920
    %922 = vadd.xlane.f32.xlu0 %v891
    %v923 = vpop.xlane.xlu0 %922
    %924 = vadd.xlane.f32.xlu0 %v893
    %v925 = vpop.xlane.xlu0 %924
    %926 = vadd.xlane.f32.xlu0 %v895
    %v927 = vpop.xlane.xlu0 %926
    %928 = vadd.xlane.f32.xlu0 %v897
    %v929 = vpop.xlane.xlu0 %928
    %930 = vadd.xlane.f32.xlu0 %v899
    %v931 = vpop.xlane.xlu0 %930
    %v932 = vlog2.pop %v901
    %v933 = vmul.f32 %v932, 0.6931472
    %v934 = vlog2.pop %v903
    %v935 = vmul.f32 %v934, 0.6931472
    %v936 = vlog2.pop %v905
    %v937 = vmul.f32 %v936, 0.6931472
    %v938 = vlog2.pop %v907
    %v939 = vmul.f32 %v938, 0.6931472
    %v940 = vlog2.pop %v909
    %v941 = vmul.f32 %v940, 0.6931472
    %v942 = vlog2.pop %v911
    %v943 = vmul.f32 %v942, 0.6931472
    %v944 = vlog2.pop %v913
    %v945 = vmul.f32 %v944, 0.6931472
    %v946 = vlog2.pop %v915
    %v947 = vmul.f32 %v946, 0.6931472
    %v948 = vlog2.pop %v917
    %v949 = vmul.f32 %v948, 0.6931472
    %v950 = vlog2.pop %v919
    %v951 = vmul.f32 %v950, 0.6931472
    %v952 = vlog2.pop %v921
    %v953 = vmul.f32 %v952, 0.6931472
    %v954 = vlog2.pop %v923
    %v955 = vmul.f32 %v954, 0.6931472
    %v956 = vlog2.pop %v925
    %v957 = vmul.f32 %v956, 0.6931472
    %v958 = vlog2.pop %v927
    %v959 = vmul.f32 %v958, 0.6931472
    %v960 = vlog2.pop %v929
    %v961 = vmul.f32 %v960, 0.6931472
    %v962 = vlog2.pop %v931
    %v963 = vmul.f32 %v962, 0.6931472
    %v964 = vsub.f32 %v852, %v933
    %v965 = vsub.f32 %v853, %v935
    %v966 = vsub.f32 %v854, %v937
    %v967 = vsub.f32 %v855, %v939
    %v968 = vsub.f32 %v856, %v941
    %v969 = vsub.f32 %v857, %v943
    %v970 = vsub.f32 %v858, %v945
    %v971 = vsub.f32 %v859, %v947
    %v972 = vsub.f32 %v860, %v949
    %v973 = vsub.f32 %v861, %v951
    %v974 = vsub.f32 %v862, %v953
    %v975 = vsub.f32 %v863, %v955
    %v976 = vsub.f32 %v864, %v957
    %v977 = vsub.f32 %v865, %v959
    %v978 = vsub.f32 %v866, %v961
    %v979 = vsub.f32 %v867, %v963
    %980 = vst [vmem:[#allocation13] sm:$0xff] %v964
    %981 = vst [vmem:[#allocation13 + $0x8] sm:$0xff] %v965
    %982 = vst [vmem:[#allocation13 + $0x10] sm:$0xff] %v966
    %983 = vst [vmem:[#allocation13 + $0x18] sm:$0xff] %v967
    %984 = vst [vmem:[#allocation13 + $0x20] sm:$0xff] %v968
    %985 = vst [vmem:[#allocation13 + $0x28] sm:$0xff] %v969
    %986 = vst [vmem:[#allocation13 + $0x30] sm:$0xff] %v970
    %987 = vst [vmem:[#allocation13 + $0x38] sm:$0xff] %v971
    %988 = vst [vmem:[#allocation13 + $0x40] sm:$0xff] %v972
    %989 = vst [vmem:[#allocation13 + $0x48] sm:$0xff] %v973
    %990 = vst [vmem:[#allocation13 + $0x50] sm:$0xff] %v974
    %991 = vst [vmem:[#allocation13 + $0x58] sm:$0xff] %v975
    %992 = vst [vmem:[#allocation13 + $0x60] sm:$0xff] %v976
    %993 = vst [vmem:[#allocation13 + $0x68] sm:$0xff] %v977
    %994 = vst [vmem:[#allocation13 + $0x70] sm:$0xff] %v978
    %995 = vst [vmem:[#allocation13 + $0x78] sm:$0xff] %v979
    // Predicated region
    $region50: #{tpu_custom_call.1} parent=1 // pred_check
      _
    $region51: #{tpu_custom_call.1} parent=1 // pred_check_branch
      %997 = sbr.rel (0) target = $region53
    $region52: #{tpu_custom_call.1} parent=1 // pred_region
      %s999 = ssub.s32 2048, 2048
      %1000 = vsyncadd [#allocation4], %s999
      %s1001 = sshll.u32 [#allocation13], 4
      %s1002 = int_to_ptr.vmem [resolvable:$true] %s1001
      %1007 = dma.vmem_to_hbm [thread:$0]  %s1002, 2048, %s6, [#allocation4], 128, 128, 8
    $region53: #{tpu_custom_call.1} parent=1 // pred_fallthru
      _
    // Predicated region
    $region54: #{tpu_custom_call.1} parent=1 // pred_check
      _
    $region55: #{tpu_custom_call.1} parent=1 // pred_check_branch
      %1009 = sbr.rel (0) target = $region57
    $region56: #{tpu_custom_call.1} parent=1 // pred_region
      %1010 = dma.done [#allocation4], 2048
    $region57: #{tpu_custom_call.1} parent=1 // pred_fallthru
      _
    %1011 = vsyncpa [#allocation3], 1
    %1012 = vsyncpa [#allocation6], 1
    %1013 = vsyncpa [#allocation9], 1
    %1014 = vsyncpa [#allocation12], 1
    %1015 = vsyncpa [#allocation4], 1

</llo_original>
